<compile_context>
chip_gen: v7x
topology: tpu7x:2x2x1
jax: 0.10.0
libtpu: 0.0.40
codegen_flags: <defaults>
</compile_context>

<pallas_src>
import jax
import jax.numpy as jnp
from jax.experimental import pallas as pl
from jax.experimental.pallas import tpu as pltpu

_LANE = 128
_SUBLANE = 8
_TARGET_BLOCK_BYTES = 4 * 1024 * 1024   # ~4 MiB per x/out block
_VMEM_LIMIT_BYTES = 32 * 1024 * 1024    # 2x(x+out)+noise+std ≈ 17-18 MiB + headroom;
                                        # within scoped/physical VMEM on v5e/v6e/v7x.


def _choose_tiles(C, S, itemsize, target_bytes):
    """Pick (c_blk, s_blk): lane-dense blocks, each <= ~target_bytes.

    Block dims are always legal: either a multiple of the (sublane, lane)
    quantum or exactly the full array dim.  Edge blocks (when C or S is not a
    multiple of the block) are handled by Pallas's masked partial writeback.
    """
    sub = max(_SUBLANE, 32 // itemsize)            # 8 (f32), 16 (bf16), 32 (int8)
    max_s = max(_LANE, (target_bytes // (sub * itemsize)) // _LANE * _LANE)
    s_blk = S if S <= max_s else max_s             # full dim, or multiple of 128
    max_c = max(1, target_bytes // (s_blk * itemsize))
    c_cap = max(sub, (max_c // sub) * sub)         # multiple of the sublane quantum
    c_blk = C if C <= c_cap else c_cap             # full dim, or multiple of `sub`
    return c_blk, s_blk


def _add_noise_kernel(std_ref, x_ref, n_ref, o_ref):
    # std_ref: (C_pad, 1) f32 — whole array, resident in VMEM (DMA'd once).
    # x_ref / o_ref: (c_blk, s_blk).   n_ref: (1, s_blk), reused across channel blocks.
    c_blk = x_ref.shape[0]
    if std_ref.shape[0] == c_blk:                  # single channel block
        std = std_ref[...]
    else:                                          # c_blk is a multiple of the sublane quantum
        c0 = pl.multiple_of(pl.program_id(2) * c_blk, c_blk)
        std = std_ref[pl.ds(c0, c_blk), :]
    # Tiny (c_blk, 1) cast keeps the wide add/mul in x's dtype (bf16 stays bf16).
    o_ref[...] = (x_ref[...] + std.astype(x_ref.dtype) * n_ref[...]).astype(o_ref.dtype)


def add_noise(x, noise, std=None, *, cat=False, block_bytes=_TARGET_BLOCK_BYTES):
    """Pallas implementation of AddNoise.forward (noise supplied explicitly)."""
    N, C = x.shape[0], x.shape[1]
    spatial = tuple(x.shape[2:])

    if cat:
        # Pure data movement: XLA's concatenate is already 1-read/1-write optimal;
        # a Pallas kernel here only adds extra HBM traffic (perf-review item).
        return jnp.concatenate([x, noise.astype(x.dtype)], axis=1)

    assert std is not None
    chan = std.shape[0]
    assert chan in (1, C), "chan must be 1 (StyleGAN2) or C (StyleGAN)"

    S = 1
    for d in spatial:
        S *= d
    itemsize = jnp.dtype(x.dtype).itemsize

    # Lane-dense flattening of the spatial dims (metadata-only for contiguous
    # NC*spatial). No padding / no output slicing: Pallas masks edge blocks.
    xf = x.reshape(N, C, S)
    nf = noise.reshape(N, 1, S).astype(x.dtype)

    c_blk, s_blk = _choose_tiles(C, S, itemsize, block_bytes)
    num_c = pl.cdiv(C, c_blk)
    num_s = pl.cdiv(S, s_blk)
    C_pad = num_c * c_blk

    # One resident (C_pad, 1) f32 std column; chan == 1 broadcasts over channels.
    # Hoisted + padded once in the wrapper (tiny array), DMA'd once into VMEM.
    std_col = jnp.broadcast_to(std.reshape(chan, 1).astype(jnp.float32), (C, 1))
    if C_pad != C:
        std_col = jnp.pad(std_col, ((0, C_pad - C), (0, 0)))

    # Grid: channel blocks innermost so the (1, s_blk) noise block index stays
    # unchanged across consecutive steps (Pallas skips the re-DMA); the large
    # batch / spatial axes stay "parallel" for megacore sharding on v7x.
    grid = (N, num_s, num_c)

    out = pl.pallas_call(
        _add_noise_kernel,
        out_shape=jax.ShapeDtypeStruct((N, C, S), x.dtype),
        grid=grid,
        in_specs=[
            pl.BlockSpec((C_pad, 1), lambda n, sb, cb: (0, 0)),            # std (resident)
            pl.BlockSpec((pl.Squeezed(), c_blk, s_blk),
                         lambda n, sb, cb: (n, cb, sb)),                   # x tile
            pl.BlockSpec((pl.Squeezed(), 1, s_blk),
                         lambda n, sb, cb: (n, 0, sb)),                    # noise (reused over cb)
        ],
        out_specs=pl.BlockSpec((pl.Squeezed(), c_blk, s_blk),
                               lambda n, sb, cb: (n, cb, sb)),
        compiler_params=pltpu.CompilerParams(
            dimension_semantics=("parallel", "parallel", "arbitrary"),
            vmem_limit_bytes=_VMEM_LIMIT_BYTES),
    )(std_col, xf, nf)
    return out.reshape((N, C) + spatial)


def _ref_add_noise(x, noise, std=None, *, cat=False):
    if cat:
        return jnp.concatenate([x, noise.astype(x.dtype)], axis=1)
    std_shape = (-1,) + (1,) * (x.ndim - 2)
    return x + std.reshape(std_shape) * noise


if __name__ == "__main__":
    key = jax.random.PRNGKey(0)
    ks = jax.random.split(key, 10)

    # --- 2D spatial (NCHW), f32 ---------------------------------------------
    N, C, H, W = 2, 4, 16, 16
    x = jax.random.normal(ks[0], (N, C, H, W), dtype=jnp.float32)
    noise = jax.random.normal(ks[1], (N, 1, H, W), dtype=jnp.float32)  # randn_like(x[:, :1])

    # cat=False, chan=1 (StyleGAN2); module __init__ sets std = zeros.
    std1 = jnp.zeros((1,), dtype=jnp.float32)
    out = jax.block_until_ready(add_noise(x, noise, std1, cat=False))
    assert jnp.allclose(out, _ref_add_noise(x, noise, std1, cat=False), atol=1e-6)

    # Nonzero std (exercises the scale path).
    std1_nz = jnp.full((1,), 0.5, dtype=jnp.float32)
    out = jax.block_until_ready(add_noise(x, noise, std1_nz, cat=False))
    assert jnp.allclose(out, _ref_add_noise(x, noise, std1_nz, cat=False), atol=1e-6)

    # cat=False, chan=C (StyleGAN), per-channel std.
    stdC = (jnp.arange(C, dtype=jnp.float32) - 1.5) * 0.25
    out = jax.block_until_ready(add_noise(x, noise, stdC, cat=False))
    assert jnp.allclose(out, _ref_add_noise(x, noise, stdC, cat=False), atol=1e-6)

    # cat=True: concatenate the noise channel (XLA concat path).
    out = jax.block_until_ready(add_noise(x, noise, cat=True))
    assert out.shape == (N, C + 1, H, W)
    assert jnp.allclose(out, _ref_add_noise(x, noise, cat=True), atol=1e-6)

    # --- spatial size not a multiple of 128 (masked lane edge, no pad/slice) --
    x2 = jax.random.normal(ks[2], (2, 4, 10, 10), dtype=jnp.float32)
    n2 = jax.random.normal(ks[3], (2, 1, 10, 10), dtype=jnp.float32)
    out = jax.block_until_ready(add_noise(x2, n2, stdC, cat=False))
    assert jnp.allclose(out, _ref_add_noise(x2, n2, stdC, cat=False), atol=1e-6)
    out = jax.block_until_ready(add_noise(x2, n2, cat=True))
    assert jnp.allclose(out, _ref_add_noise(x2, n2, cat=True), atol=1e-6)

    # --- 3D spatial (NCDHW, as used inside ConvBlock_up), f32 ----------------
    x3 = jax.random.normal(ks[4], (2, 4, 6, 6, 6), dtype=jnp.float32)
    n3 = jax.random.normal(ks[5], (2, 1, 6, 6, 6), dtype=jnp.float32)
    out = jax.block_until_ready(add_noise(x3, n3, std1_nz, cat=False))
    assert jnp.allclose(out, _ref_add_noise(x3, n3, std1_nz, cat=False), atol=1e-6)

    # --- forced small blocks: partial channel + spatial edge blocks, f32 -----
    # C=12 -> c_blk=8 (edge block masked, std padded & dynamically sliced);
    # S=144 -> s_blk=128 (2 spatial blocks, masked lane edge).
    x4 = jax.random.normal(ks[6], (2, 12, 12, 12), dtype=jnp.float32)
    n4 = jax.random.normal(ks[7], (2, 1, 12, 12), dtype=jnp.float32)
    std12 = (jnp.arange(12, dtype=jnp.float32) - 5.5) * 0.2
    out = jax.block_until_ready(add_noise(x4, n4, std12, cat=False, block_bytes=4096))
    assert jnp.allclose(out, _ref_add_noise(x4, n4, std12, cat=False), atol=1e-6)

    # --- bf16 activations (bf16 in-kernel compute), incl. forced tiling ------
    xb = x.astype(jnp.bfloat16)
    nb = noise.astype(jnp.bfloat16)
    out = jax.block_until_ready(add_noise(xb, nb, std1_nz, cat=False))
    ref = _ref_add_noise(xb, nb, std1_nz, cat=False)
    assert out.dtype == jnp.bfloat16
    assert jnp.allclose(out.astype(jnp.float32), ref.astype(jnp.float32),
                        rtol=2e-2, atol=2e-2)

    x5 = jax.random.normal(ks[8], (2, 24, 12, 12), dtype=jnp.bfloat16)
    n5 = jax.random.normal(ks[9], (2, 1, 12, 12), dtype=jnp.bfloat16)
    std24 = (jnp.arange(24, dtype=jnp.float32) - 11.5) * 0.1
    out = jax.block_until_ready(add_noise(x5, n5, std24, cat=False, block_bytes=2048))
    ref = _ref_add_noise(x5, n5, std24, cat=False)
    assert jnp.allclose(out.astype(jnp.float32), ref.astype(jnp.float32),
                        rtol=2e-2, atol=2e-2)

    print("KERNEL_OK")
</pallas_src>

<mosaic_0001>
module attributes {stable_mosaic.version = 11 : i64} {
  func.func @_add_noise_kernel(%arg0: i32, %arg1: i32, %arg2: i32, %arg3: memref<4x1xf32, #tpu.memory_space<vmem>>, %arg4: memref<1x4x256xf32, #tpu.memory_space<vmem>>, %arg5: memref<1x1x256xf32, #tpu.memory_space<vmem>>, %arg6: memref<1x4x256xf32, #tpu.memory_space<vmem>>) attributes {dimension_semantics = [#tpu.dimension_semantics<parallel>, #tpu.dimension_semantics<parallel>, #tpu.dimension_semantics<arbitrary>], iteration_bounds = array<i64: 2, 1, 1>, scalar_prefetch = 0 : i64, scratch_operands = 0 : i64, tpu.core_type = #tpu.core_type<tc>, window_params = [{pipeline_mode = #tpu.pipeline_mode<synchronous>, transform_indices = @transform_0, window_bounds = array<i64: 4, 1>}, {transform_indices = @transform_1, window_bounds = array<i64: 1, 4, 256>}, {transform_indices = @transform_2, window_bounds = array<i64: 1, 1, 256>}, {transform_indices = @transform_3, window_bounds = array<i64: 1, 4, 256>}]} {
    %c0 = arith.constant 0 : index
    %c0_0 = arith.constant 0 : index
    %0 = vector.load %arg3[%c0, %c0_0] : memref<4x1xf32, #tpu.memory_space<vmem>>, vector<4x1xf32>
    %c0_1 = arith.constant 0 : index
    %c0_2 = arith.constant 0 : index
    %c0_3 = arith.constant 0 : index
    %1 = vector.load %arg4[%c0_1, %c0_2, %c0_3] : memref<1x4x256xf32, #tpu.memory_space<vmem>>, vector<1x4x256xf32>
    %2 = vector.shape_cast %1 : vector<1x4x256xf32> to vector<4x256xf32>
    %c0_4 = arith.constant 0 : index
    %c0_5 = arith.constant 0 : index
    %c0_6 = arith.constant 0 : index
    %3 = vector.load %arg5[%c0_4, %c0_5, %c0_6] : memref<1x1x256xf32, #tpu.memory_space<vmem>>, vector<1x1x256xf32>
    %4 = vector.shape_cast %3 : vector<1x1x256xf32> to vector<1x256xf32>
    %5 = vector.broadcast %0 : vector<4x1xf32> to vector<4x256xf32>
    %6 = vector.broadcast %4 : vector<1x256xf32> to vector<4x256xf32>
    %7 = arith.mulf %5, %6 : vector<4x256xf32>
    %8 = arith.addf %2, %7 : vector<4x256xf32>
    %c0_7 = arith.constant 0 : index
    %c0_8 = arith.constant 0 : index
    %c0_9 = arith.constant 0 : index
    %9 = vector.load %arg6[%c0_7, %c0_8, %c0_9] : memref<1x4x256xf32, #tpu.memory_space<vmem>>, vector<1x4x256xf32>
    %10 = vector.shape_cast %9 : vector<1x4x256xf32> to vector<4x256xf32>
    %11 = vector.shape_cast %8 : vector<4x256xf32> to vector<1x4x256xf32>
    tpu.vector_store %arg6[%c0_7, %c0_8, %c0_9], %11 {strides = array<i32>} : memref<1x4x256xf32, #tpu.memory_space<vmem>>, vector<1x4x256xf32>,
    return
  }
  func.func @transform_0(%arg0: i32, %arg1: i32, %arg2: i32) -> (i32, i32) {
    %c0_i32 = arith.constant 0 : i32
    %c0_i32_0 = arith.constant 0 : i32
    %c0_i32_1 = arith.constant 0 : i32
    return %c0_i32, %c0_i32_0 : i32, i32
  }
  func.func @transform_1(%arg0: i32, %arg1: i32, %arg2: i32) -> (i32, i32, i32) {
    %c0_i32 = arith.constant 0 : i32
    return %arg0, %arg2, %arg1 : i32, i32, i32
  }
  func.func @transform_2(%arg0: i32, %arg1: i32, %arg2: i32) -> (i32, i32, i32) {
    %c0_i32 = arith.constant 0 : i32
    %c0_i32_0 = arith.constant 0 : i32
    return %arg0, %c0_i32, %arg1 : i32, i32, i32
  }
  func.func @transform_3(%arg0: i32, %arg1: i32, %arg2: i32) -> (i32, i32, i32) {
    %c0_i32 = arith.constant 0 : i32
    return %arg0, %arg2, %arg1 : i32, i32, i32
  }
}

</mosaic_0001>

<llo_original>
// kernel: tpu_custom_call.1
$region0: #{tpu_custom_call.1}
  #allocation0 [shape = 'u32[]', space=smem, size = 0x4, offset = 0x4, fixed_abs, tag = 'smem constant byte address 0x4 - core index']
  #allocation1 [shape = 'u32[144,128]{1,0:T(1,128)}', space=vmem, size = 0x12000, scoped, tag = 'internal scratch']
  %s0 = inlined_call_operand.vmem [shape: f32[4,1], index: 0, kind: input, shape index: {}]
  %s1 = inlined_call_operand.hbm [shape: f32[2,4,256], index: 1, kind: input, shape index: {}]
  %s2 = inlined_call_operand.vmem [shape: f32[2,1,256], index: 2, kind: input, shape index: {}]
  %s3 = inlined_call_operand.hbm [shape: f32[2,4,256], index: 3, kind: output, shape index: {}]
  %s4 = sld [smem:[#allocation0]]
  $region49: #{tpu_custom_call.1} parent=0
    _
  %s6 = ssub.s32 1, %s4
  %s7 = scalar_select 0, %s6, %s4
  $region1: #{tpu_custom_call.1} parent=0
    #allocation2 [shape = 'u8[8192]{0}', space=vmem, size = 0x2000, scoped, tag = 'input window, operand 1']
    #allocation3 [shape = 's32[2]{0}', space=sflag, size = 0x8, scoped, tag = 'scoped memory for tpu_custom_call.1']
    #allocation4 [shape = 's32[2]{0}', space=sflag, size = 0x8, scoped, tag = 'scoped memory for tpu_custom_call.1']
    #allocation5 [shape = 'u8[8192]{0}', space=vmem, size = 0x2000, scoped, tag = 'output window, operand 0']
    %8 = vsyncpa [#allocation3], 0
    %s9 = scalar_lea.sflag [#allocation3], 1
    %10 = vsyncpa %s9, 0
    %11 = vsyncpa [#allocation4], 0
    %s12 = scalar_lea.sflag [#allocation4], 1
    %13 = vsyncpa %s12, 0
    loop: start=0, step=1, limit=4
    $region2: #{tpu_custom_call.1} parent=1 // loop_pre_header
      _
    $region3: #{tpu_custom_call.1} parent=1 // loop_header
      %s15 = sphi 0, %s19
      %p16 = scmp.ge.s32.totalorder %s15, 4
      %s22 = sphi 0, %s41
      %s23 = sphi 0, %s37
      %s24 = sphi 0, %s33
      %s25 = sphi 0, %s22
      %s26 = sphi 0, %s23
      %s27 = sphi 0, %s24
      %s28 = sphi 0, %s25
      %s29 = sphi 0, %s26
      %s30 = sphi 0, %s27
      %s42 = sphi 0, %s42
      %s44 = sphi 0, %s42
      %s45 = sphi 0, %s44
      %s59 = sphi 0, %s45
      %s69 = sphi 0, %s71
      %s72 = sphi 0, %s69
      %s73 = sphi 0, %s72
      %s89 = sphi 0, %s73
      %s97 = sphi 0, %s99
      %s100 = sphi 0, %s97
      %s101 = sphi 0, %s100
      %s117 = sphi 0, %s101
      %s127 = sphi 0, %s129
      %s130 = sphi 0, %s127
      %s131 = sphi 0, %s130
      %s147 = sphi 0, %s131
    $region4: #{tpu_custom_call.1} parent=1 // loop_header_branch
      %18 = sbr.rel (%p16) target = $region8
    $region5: #{tpu_custom_call.1} parent=1 // loop_body
      %s20 = ssub.s32 %s15, 1
      %s21 = ssub.s32 %s15, 2
      %s31 = sadd.s32 1, %s24
      %p32 = scmp.ge.s32.totalorder %s31, 1
      %s33 = scalar_select %p32, 0, %s31
      %s34 = sadd.s32 1, %s23
      %s35 = scalar_select %p32, %s34, %s23
      %p36 = scmp.ge.s32.totalorder %s35, 1
      %s37 = scalar_select %p36, 0, %s35
      %s38 = sadd.s32 1, %s22
      %s39 = scalar_select %p36, %s38, %s22
      %p40 = scmp.ge.s32.totalorder %s39, 2
      %s41 = scalar_select %p40, 0, %s39
      %s43 = sadd.s32 %s42, 1
      %p46 = scmp.eq.s32.totalorder %s15, 1
      %p47 = scmp.ne.s32.totalorder %s42, %s44
      %p48 = scmp.eq.s32.totalorder %s15, 0
      %p49 = por %p47, %p48
      %p50 = scmp.ne.s32.totalorder %s42, %s44
      %p51 = scmp.eq.s32.totalorder %s20, 1
      %p52 = por %p50, %p51
      %p53 = scmp.ne.s32.totalorder %s44, %s45
      %p54 = scmp.eq.s32.totalorder %s20, 0
      %p55 = por %p53, %p54
      %p56 = scmp.ne.s32.totalorder %s44, %s45
      %p57 = scmp.eq.s32.totalorder %s21, 1
      %p58 = por %p56, %p57
      %p60 = scmp.ne.s32.totalorder %s45, %s59
      %p61 = scmp.eq.s32.totalorder %s21, 0
      %p62 = por %p60, %p61
      %s63 = ssub.s32 %s22, %s41
      %s64 = ssub.s32 %s24, %s33
      %s65 = sor.u32 %s63, %s64
      %s66 = ssub.s32 %s23, %s37
      %s67 = sor.u32 %s65, %s66
      %p68 = scmp.eq.s32.totalorder %s67, 0
      %s70 = sadd.s32 %s69, 1
      %s71 = scalar_select %p68, %s69, %s70
      %p74 = pneg %p68
      %p75 = scmp.eq.s32.totalorder %s15, 1
      %p76 = por %p74, %p75
      %p77 = scmp.ne.s32.totalorder %s69, %s72
      %p78 = scmp.eq.s32.totalorder %s15, 0
      %p79 = por %p77, %p78
      %p80 = scmp.ne.s32.totalorder %s69, %s72
      %p81 = scmp.eq.s32.totalorder %s20, 1
      %p82 = por %p80, %p81
      %p83 = scmp.ne.s32.totalorder %s72, %s73
      %p84 = scmp.eq.s32.totalorder %s20, 0
      %p85 = por %p83, %p84
      %p86 = scmp.ne.s32.totalorder %s72, %s73
      %p87 = scmp.eq.s32.totalorder %s21, 1
      %p88 = por %p86, %p87
      %p90 = scmp.ne.s32.totalorder %s73, %s89
      %p91 = scmp.eq.s32.totalorder %s21, 0
      %p92 = por %p90, %p91
      %s93 = ssub.s32 %s22, %s41
      %s94 = ssub.s32 %s23, %s37
      %s95 = sor.u32 %s93, %s94
      %p96 = scmp.eq.s32.totalorder %s95, 0
      %s98 = sadd.s32 %s97, 1
      %s99 = scalar_select %p96, %s97, %s98
      %p102 = pneg %p96
      %p103 = scmp.eq.s32.totalorder %s15, 1
      %p104 = por %p102, %p103
      %p105 = scmp.ne.s32.totalorder %s97, %s100
      %p106 = scmp.eq.s32.totalorder %s15, 0
      %p107 = por %p105, %p106
      %p108 = scmp.ne.s32.totalorder %s97, %s100
      %p109 = scmp.eq.s32.totalorder %s20, 1
      %p110 = por %p108, %p109
      %p111 = scmp.ne.s32.totalorder %s100, %s101
      %p112 = scmp.eq.s32.totalorder %s20, 0
      %p113 = por %p111, %p112
      %p114 = scmp.ne.s32.totalorder %s100, %s101
      %p115 = scmp.eq.s32.totalorder %s21, 1
      %p116 = por %p114, %p115
      %p118 = scmp.ne.s32.totalorder %s101, %s117
      %p119 = scmp.eq.s32.totalorder %s21, 0
      %p120 = por %p118, %p119
      %s121 = ssub.s32 %s22, %s41
      %s122 = ssub.s32 %s24, %s33
      %s123 = sor.u32 %s121, %s122
      %s124 = ssub.s32 %s23, %s37
      %s125 = sor.u32 %s123, %s124
      %p126 = scmp.eq.s32.totalorder %s125, 0
      %s128 = sadd.s32 %s127, 1
      %s129 = scalar_select %p126, %s127, %s128
      %p132 = pneg %p126
      %p133 = scmp.eq.s32.totalorder %s15, 1
      %p134 = por %p132, %p133
      %p135 = scmp.ne.s32.totalorder %s127, %s130
      %p136 = scmp.eq.s32.totalorder %s15, 0
      %p137 = por %p135, %p136
      %p138 = scmp.ne.s32.totalorder %s127, %s130
      %p139 = scmp.eq.s32.totalorder %s20, 1
      %p140 = por %p138, %p139
      %p141 = scmp.ne.s32.totalorder %s130, %s131
      %p142 = scmp.eq.s32.totalorder %s20, 0
      %p143 = por %p141, %p142
      %p144 = scmp.ne.s32.totalorder %s130, %s131
      %p145 = scmp.eq.s32.totalorder %s21, 1
      %p146 = por %p144, %p145
      %p148 = scmp.ne.s32.totalorder %s131, %s147
      %p149 = scmp.eq.s32.totalorder %s21, 0
      %p150 = por %p148, %p149
      %p151 = scmp.le.s32.totalorder 1, %s15
      %p152 = scmp.lt.s32.totalorder %s15, 3
      %p153 = pnand %p151, %p152
      %p154 = pneg %p153
      // Predicated region
      $region9: #{tpu_custom_call.1} parent=5 // pred_check
        _
      $region10: #{tpu_custom_call.1} parent=5 // pred_check_branch
        %156 = sbr.rel (%p153) target = $region12
      $region11: #{tpu_custom_call.1} parent=5 // pred_region
        %s157 = ssub.s32 %s15, 1
        // Predicated region
        $region13: #{tpu_custom_call.1} parent=11 // pred_check
          %p158 = pneg %p55
        $region14: #{tpu_custom_call.1} parent=11 // pred_check_branch
          %160 = sbr.rel (%p158) target = $region16
        $region15: #{tpu_custom_call.1} parent=11 // pred_region
          _
        $region16: #{tpu_custom_call.1} parent=11 // pred_fallthru
          _
      $region12: #{tpu_custom_call.1} parent=5 // pred_fallthru
        _
      %p161 = scmp.lt.s32.totalorder %s15, 2
      // Predicated region
      $region17: #{tpu_custom_call.1} parent=5 // pred_check
        %p162 = pneg %p161
      $region18: #{tpu_custom_call.1} parent=5 // pred_check_branch
        %164 = sbr.rel (%p162) target = $region20
      $region19: #{tpu_custom_call.1} parent=5 // pred_region
        // Predicated region
        $region21: #{tpu_custom_call.1} parent=19 // pred_check
          %p165 = pneg %p79
        $region22: #{tpu_custom_call.1} parent=19 // pred_check_branch
          %167 = sbr.rel (%p165) target = $region24
        $region23: #{tpu_custom_call.1} parent=19 // pred_region
          %s168 = sand.u32 %s69, 1
          %s169 = scalar_lea.sflag [#allocation3], %s168
          %s170 = sand.u32 %s69, 1
          %s171 = smul.addr %s170, 8
          %s172 = scalar_lea.vmem [#allocation2], %s171
          %s173 = smul.u32 2, %s23
          %s175 = ssub.s32 128, 128
          %176 = vsyncadd %s169, %s175
          %s177 = smul.addr %s24, 2
          %s178 = sadd.s32 %s173, %s177
          %s179 = smul.addr %s22, 2
          %s180 = sadd.s32 %s178, %s179
          %s181 = smul.addr %s180, 64
          %s182 = scalar_lea.hbm %s1, %s181
          %s184 = sshll.u32 %s172, 4
          %s185 = int_to_ptr.vmem [resolvable:$true] %s184
          %187 = dma.hbm_to_vmem [thread:$0]  %s182, 128, %s185, %s169
        $region24: #{tpu_custom_call.1} parent=19 // pred_fallthru
          _
        // Predicated region
        $region25: #{tpu_custom_call.1} parent=19 // pred_check
          %p188 = pneg %p107
        $region26: #{tpu_custom_call.1} parent=19 // pred_check_branch
          %190 = sbr.rel (%p188) target = $region28
        $region27: #{tpu_custom_call.1} parent=19 // pred_region
          %s191 = smul.u32 2, %s23
          %p192 = scmp.lt.s32.totalorder %s22, 1
          %s193 = scalar_select %p192, %s22, 1
          %p194 = scmp.lt.s32.totalorder %s191, 1
          %s195 = scalar_select %p194, %s191, 1
          %s196 = smul.addr %s193, 2
          %s197 = sadd.s32 %s195, %s196
          %s198 = scalar_lea.vmem %s2, %s197
          %s199 = smul.u32 2, %s23
        $region28: #{tpu_custom_call.1} parent=19 // pred_fallthru
          _
      $region20: #{tpu_custom_call.1} parent=5 // pred_fallthru
        _
      %p200 = scmp.le.s32.totalorder 1, %s15
      %p201 = scmp.lt.s32.totalorder %s15, 3
      %p202 = pnand %p200, %p201
      %p203 = pneg %p202
      // Predicated region
      $region29: #{tpu_custom_call.1} parent=5 // pred_check
        _
      $region30: #{tpu_custom_call.1} parent=5 // pred_check_branch
        %205 = sbr.rel (%p202) target = $region32
      $region31: #{tpu_custom_call.1} parent=5 // pred_region
        %s206 = ssub.s32 %s15, 1
        %s207 = sand.u32 %s72, 1
        %s208 = scalar_lea.sflag [#allocation3], %s207
        %s209 = sand.u32 %s72, 1
        %s210 = smul.addr %s209, 8
        %s211 = scalar_lea.vmem [#allocation2], %s210
        // Predicated region
        $region33: #{tpu_custom_call.1} parent=31 // pred_check
          %p212 = pneg %p85
        $region34: #{tpu_custom_call.1} parent=31 // pred_check_branch
          %214 = sbr.rel (%p212) target = $region36
        $region35: #{tpu_custom_call.1} parent=31 // pred_region
          %215 = dma.done %s208, 128
        $region36: #{tpu_custom_call.1} parent=31 // pred_fallthru
          _
        %p216 = pneg %p55
        %p217 = pneg %p52
        %s218 = sand.u32 %s72, 1
        %s219 = scalar_lea.sflag [#allocation3], %s218
        %s220 = sand.u32 %s72, 1
        %s221 = smul.addr %s220, 8
        %s222 = scalar_lea.vmem [#allocation2], %s221
        %p223 = pneg %p85
        %p224 = pneg %p82
        %s225 = smul.u32 2, %s26
        %p226 = scmp.lt.s32.totalorder %s25, 1
        %s227 = scalar_select %p226, %s25, 1
        %p228 = scmp.lt.s32.totalorder %s225, 1
        %s229 = scalar_select %p228, %s225, 1
        %s230 = smul.addr %s227, 2
        %s231 = sadd.s32 %s229, %s230
        %s232 = scalar_lea.vmem %s2, %s231
        %p233 = pneg %p113
        %p234 = pneg %p110
        %p235 = pneg %p143
        %p236 = pneg %p140
        %s237 = sand.u32 %s130, 1
        %s238 = scalar_lea.sflag [#allocation4], %s237
        %s239 = sand.u32 %s130, 1
        %s240 = smul.addr %s239, 8
        %s241 = scalar_lea.vmem [#allocation5], %s240
        %s242 = smul.u32 2, %s26
        %s243 = smul.u32 2, %s26
        %p244 = scmp.lt.s32.totalorder %s25, 1
        %s245 = scalar_select %p244, %s25, 1
        %p246 = scmp.lt.s32.totalorder %s243, 1
        %s247 = scalar_select %p246, %s243, 1
        %s248 = smul.addr %s245, 2
        %s249 = sadd.s32 %s247, %s248
        %s250 = scalar_lea.vmem %s2, %s249
        %s251 = smul.u32 2, %s26
        %s252 = smul.u32 2, %s26
        %v253 = vld [vmem:[%s0] sm:$0xf]
        %v254 = vld [vmem:[%s211] sm:$0xff]
        %v255 = vld [vmem:[%s250] sm:$0x3]
        %257 = vset.pattern.permute.xlu0 0
        %258 = vperm.xlu0 %257, %v253
        %v259 = vpop.permute.xlu0 %258
        %v262 = vlaneseq
        %v263 = vshrl.u32 %v262, 7
        %v264 = vsub.s32 0, %v263
        %v265 = vrot.slane %v255, %v264
        %v266 = vlaneseq
        %v267 = vshrl.u32 %v266, 7
        %v268 = vsub.s32 1, %v267
        %v269 = vrot.slane %v255, %v268
        %v272 = vmul.f32 %v259, %v265
        %v273 = vmul.f32 %v259, %v269
        %v276 = vcombine.low %v272, %v273
        %v278 = vadd.f32 %v254, %v276
        %279 = vst [vmem:[%s241] sm:$0xff] %v278
        %s280 = sand.u32 %s130, 1
        %s281 = scalar_lea.sflag [#allocation4], %s280
        %s282 = sand.u32 %s130, 1
        %s283 = smul.addr %s282, 8
        %s284 = scalar_lea.vmem [#allocation5], %s283
        // Predicated region
        $region37: #{tpu_custom_call.1} parent=31 // pred_check
          %p285 = pneg %p140
        $region38: #{tpu_custom_call.1} parent=31 // pred_check_branch
          %287 = sbr.rel (%p285) target = $region40
        $region39: #{tpu_custom_call.1} parent=31 // pred_region
          %s288 = smul.u32 2, %s26
          %s290 = ssub.s32 128, 128
          %291 = vsyncadd %s281, %s290
          %s292 = smul.addr %s27, 2
          %s293 = sadd.s32 %s288, %s292
          %s294 = smul.addr %s25, 2
          %s295 = sadd.s32 %s293, %s294
          %s296 = smul.addr %s295, 64
          %s297 = scalar_lea.hbm %s3, %s296
          %s299 = sshll.u32 %s284, 4
          %s300 = int_to_ptr.vmem [resolvable:$true] %s299
          %302 = dma.vmem_to_hbm [thread:$0]  %s300, 128, %s297, %s281
        $region40: #{tpu_custom_call.1} parent=31 // pred_fallthru
          _
      $region32: #{tpu_custom_call.1} parent=5 // pred_fallthru
        _
      %p303 = scmp.le.s32.totalorder 2, %s15
      // Predicated region
      $region41: #{tpu_custom_call.1} parent=5 // pred_check
        %p304 = pneg %p303
      $region42: #{tpu_custom_call.1} parent=5 // pred_check_branch
        %306 = sbr.rel (%p304) target = $region44
      $region43: #{tpu_custom_call.1} parent=5 // pred_region
        %s307 = ssub.s32 %s15, 2
        // Predicated region
        $region45: #{tpu_custom_call.1} parent=43 // pred_check
          %p308 = pneg %p146
        $region46: #{tpu_custom_call.1} parent=43 // pred_check_branch
          %310 = sbr.rel (%p308) target = $region48
        $region47: #{tpu_custom_call.1} parent=43 // pred_region
          %s311 = sand.u32 %s131, 1
          %s312 = scalar_lea.sflag [#allocation4], %s311
          %s313 = sand.u32 %s131, 1
          %s314 = smul.addr %s313, 8
          %s315 = scalar_lea.vmem [#allocation5], %s314
          %316 = dma.done %s312, 128
        $region48: #{tpu_custom_call.1} parent=43 // pred_fallthru
          _
      $region44: #{tpu_custom_call.1} parent=5 // pred_fallthru
        _
    $region6: #{tpu_custom_call.1} parent=1 // loop_footer
      %s19 = sadd.s32 1, %s15
    $region7: #{tpu_custom_call.1} parent=1 // loop_footer_branch
      %14 = sbr.rel target = $region3
    $region8: #{tpu_custom_call.1} parent=1 // loop_exit
      _
    %317 = vsyncpa [#allocation3], 1
    %s318 = scalar_lea.sflag [#allocation3], 1
    %319 = vsyncpa %s318, 1
    %320 = vsyncpa [#allocation4], 1
    %s321 = scalar_lea.sflag [#allocation4], 1
    %322 = vsyncpa %s321, 1

</llo_original>
